<compile_context>
chip_gen: v5e
topology: v5e:2x2
jax: 0.10.0
libtpu: 0.0.40
codegen_flags: <defaults>
</compile_context>

<pallas_src>
import jax
import jax.numpy as jnp
from jax.experimental import pallas as pl
from jax.experimental.pallas import tpu as pltpu

_BN_EPS = 1e-5
_SUB = 16      # bf16 sublane packing: pad row allocations / batch to 16
_LANE = 128    # lane width: pad final output columns to 128


def _round_up(x, m):
    return (x + m - 1) // m * m


# ---------------------------------------------------------------------------
# Kernel: the whole network as a straight-line chain of matmuls over one bf16
# weight slab + one f32 bias slab.  `layer_cfg` is a static Python tuple of
# (row_offset, din, dout, bias_row, relu) ints, so every slice below is a
# static (compile-time) ref slice.
# ---------------------------------------------------------------------------
def _make_kernel(layer_cfg):
    def kernel(x_ref, w_ref, b_ref, o_ref):
        h = x_ref[...]                                    # (TB, IN) bf16
        for off, din, dout, bi, relu in layer_cfg:
            w = w_ref[pl.ds(off, din), pl.ds(0, dout)]    # (din, dout) bf16
            y = jnp.dot(h, w, preferred_element_type=jnp.float32)
            y = y + b_ref[pl.ds(bi, 1), pl.ds(0, dout)]   # f32 bias broadcast
            if relu:
                h = jnp.maximum(y, 0.0).astype(jnp.bfloat16)
            else:
                h = y                                     # final plain Linear
        o_ref[...] = h.astype(o_ref.dtype)
    return kernel


# ---------------------------------------------------------------------------
# Parameter construction: PyTorch-default init, BN folded into the Linear,
# branches fused, everything packed into one weight slab + one bias slab.
# ---------------------------------------------------------------------------
def _init_linear(key, din, dout):
    kw, kb = jax.random.split(key)
    bound = 1.0 / (din ** 0.5)
    # Stored as (din, dout) == PyTorch weight (dout, din) transposed.
    w = jax.random.uniform(kw, (din, dout), jnp.float32, -bound, bound)
    b = jax.random.uniform(kb, (1, dout), jnp.float32, -bound, bound)
    return w, b


def _fold_bn(w, b):
    # Linear -> BatchNorm1d -> ReLU with BN default running stats
    # (mean=0, var=1, gamma=1, beta=0):  W' = W*scale, b' = b*scale + shift.
    dout = w.shape[1]
    gamma = jnp.ones((1, dout), jnp.float32)
    beta = jnp.zeros((1, dout), jnp.float32)
    mean = jnp.zeros((1, dout), jnp.float32)
    var = jnp.ones((1, dout), jnp.float32)
    scale = gamma / jnp.sqrt(var + _BN_EPS)
    shift = beta - mean * scale
    return w * scale, b * scale + shift


def _block_diag(a, b):
    m, n = a.shape
    p, q = b.shape
    out = jnp.zeros((m + p, n + q), a.dtype)
    out = out.at[:m, :n].set(a)
    out = out.at[m:, n:].set(b)
    return out


def build_joint_imu_mlp(key, input_size, hidden_size, output_size):
    """Returns (forward_fn, (w_slab, b_slab))."""
    H = hidden_size
    h4, h16 = H // 4, H // 16
    keys = jax.random.split(key, 11)

    def lin_bn(k, din, dout):
        return _fold_bn(*_init_linear(k, din, dout))

    # TODO(synk): the reference loads the pid branch (weights + BN running
    # stats) from a checkpoint on disk; replaced by deterministic in-script
    # init with BN default running stats (same shapes, same forward structure).
    p1w, p1b = lin_bn(keys[0], input_size, H)     # pid MLP-1
    p2w, p2b = lin_bn(keys[1], H, h4)
    p3w, p3b = lin_bn(keys[2], h4, h4)            # pid MLP-2 (Dropout = identity)
    p4w, p4b = lin_bn(keys[3], h4, h16)           # pid final Linear -> Identity
    f1w, f1b = lin_bn(keys[4], input_size, H)     # action_features MLP
    f2w, f2b = lin_bn(keys[5], H, h4)
    a1w, a1b = lin_bn(keys[6], h16 + h4, H)       # action IMU_MLP, input = cat
    a2w, a2b = lin_bn(keys[7], H, h4)
    a3w, a3b = lin_bn(keys[8], h4, h4)
    a4w, a4b = lin_bn(keys[9], h4, h16)
    a5w, a5b = _init_linear(keys[10], h16, output_size)   # plain final Linear

    eye4 = jnp.eye(h4, dtype=jnp.float32)
    z4 = jnp.zeros((1, h4), jnp.float32)

    # Fused layer list: (weight (din,dout), bias (1,dout), relu?)
    # Identity blocks carry act_feat alongside the pid branch so L4's output
    # is exactly torch.cat((pid_out, act_feat), dim=1) without a concat op.
    layers = [
        (jnp.concatenate([p1w, f1w], axis=1),
         jnp.concatenate([p1b, f1b], axis=1), True),                 # (IN, 2H)
        (_block_diag(p2w, f2w), jnp.concatenate([p2b, f2b], axis=1), True),
        (_block_diag(p3w, eye4), jnp.concatenate([p3b, z4], axis=1), True),
        (_block_diag(p4w, eye4), jnp.concatenate([p4b, z4], axis=1), True),
        (a1w, a1b, True),
        (a2w, a2b, True),
        (a3w, a3b, True),
        (a4w, a4b, True),
        (a5w, a5b, False),
    ]

    in_pad = _round_up(input_size, _SUB)
    out_cols = _round_up(output_size, _LANE)      # lane-dense final store

    # Pack everything into ONE bf16 weight slab + ONE f32 bias slab.
    # Every layer's row allocation and output width is padded to a multiple of
    # 16 (zeros), so all in-kernel slices are sublane-aligned and the padded
    # activation columns stay exactly zero through the whole chain.
    offs = []
    total = 0
    max_cols = out_cols
    for i, (w, _b, _r) in enumerate(layers):
        din, dout = w.shape
        din_p = in_pad if i == 0 else _round_up(din, _SUB)
        dout_p = out_cols if i == len(layers) - 1 else _round_up(dout, _SUB)
        offs.append((total, din_p, dout_p))
        total += din_p
        max_cols = max(max_cols, dout_p)
    slab_cols = _round_up(max_cols, _LANE)

    w_slab = jnp.zeros((total, slab_cols), jnp.float32)
    b_slab = jnp.zeros((_round_up(len(layers), _SUB), slab_cols), jnp.float32)
    cfg = []
    for i, ((w, b, relu), (off, din_p, dout_p)) in enumerate(zip(layers, offs)):
        din, dout = w.shape
        w_slab = w_slab.at[off:off + din, :dout].set(w)
        b_slab = b_slab.at[i, :dout].set(b[0])
        cfg.append((off, din_p, dout_p, i, relu))
    w_slab = w_slab.astype(jnp.bfloat16)
    layer_cfg = tuple(cfg)

    kernel = _make_kernel(layer_cfg)

    @jax.jit
    def forward(x, w_slab, b_slab):
        B = x.shape[0]
        xf = x.reshape(B, -1).astype(jnp.bfloat16)        # x.view(B, -1), bf16
        # Batch tile: sublane-dense, divides the padded batch exactly.
        tb = min(256, _round_up(max(B, 1), _SUB))
        bp = _round_up(B, tb)
        xf = jnp.pad(xf, ((0, bp - B), (0, in_pad - xf.shape[1])))

        n_rows, n_cols = w_slab.shape
        n_brows = b_slab.shape[0]

        out = pl.pallas_call(
            kernel,
            out_shape=jax.ShapeDtypeStruct((bp, out_cols), jnp.float32),
            grid_spec=pltpu.PrefetchScalarGridSpec(
                num_scalar_prefetch=0,
                grid=(bp // tb,),
                in_specs=[
                    pl.BlockSpec((tb, in_pad), lambda i: (i, 0)),        # x tile
                    pl.BlockSpec((n_rows, n_cols), lambda i: (0, 0)),    # weights (resident)
                    pl.BlockSpec((n_brows, n_cols), lambda i: (0, 0)),   # biases  (resident)
                ],
                out_specs=pl.BlockSpec((tb, out_cols), lambda i: (i, 0)),
            ),
            compiler_params=pltpu.CompilerParams(
                dimension_semantics=("parallel",),   # v7x: shard batch tiles over 2 TCs
                vmem_limit_bytes=32 * 1024 * 1024,   # safe on v5e/v6e/v7x; usage < 2 MiB
            ),
        )(xf, w_slab, b_slab)
        # Drop padded batch rows and padded output lanes.
        return out[:B, :output_size]

    return forward, (w_slab, b_slab)


# ---------------------------------------------------------------------------
if __name__ == "__main__":
    key = jax.random.PRNGKey(0)
    kx, kp = jax.random.split(key)

    B, C, T = 4, 6, 32            # IMU: batch x channels x timesteps
    input_size = C * T            # 192
    hidden_size = 64              # H/4 = 16, H/16 = 4
    output_size = 10

    forward, (w_slab, b_slab) = build_joint_imu_mlp(
        kp, input_size, hidden_size, output_size)

    x = jax.random.normal(kx, (B, C, T), dtype=jnp.float32)
    out = jax.block_until_ready(forward(x, w_slab, b_slab))
    assert out.shape == (B, output_size), out.shape
    assert bool(jnp.all(jnp.isfinite(out)))
    print("KERNEL_OK")
</pallas_src>

<mosaic_0001>
module attributes {stable_mosaic.version = 11 : i64} {
  func.func @kernel(%arg0: i32, %arg1: memref<16x192xbf16, #tpu.memory_space<vmem>>, %arg2: memref<528x128xbf16, #tpu.memory_space<vmem>>, %arg3: memref<16x128xf32, #tpu.memory_space<vmem>>, %arg4: memref<16x128xf32, #tpu.memory_space<vmem>>) attributes {dimension_semantics = [#tpu.dimension_semantics<parallel>], iteration_bounds = array<i64: 1>, scalar_prefetch = 0 : i64, scratch_operands = 0 : i64, tpu.core_type = #tpu.core_type<tc>, window_params = [{transform_indices = @transform_0, window_bounds = array<i64: 16, 192>}, {pipeline_mode = #tpu.pipeline_mode<synchronous>, transform_indices = @transform_1, window_bounds = array<i64: 528, 128>}, {pipeline_mode = #tpu.pipeline_mode<synchronous>, transform_indices = @transform_2, window_bounds = array<i64: 16, 128>}, {transform_indices = @transform_3, window_bounds = array<i64: 16, 128>}]} {
    %c0 = arith.constant 0 : index
    %c0_0 = arith.constant 0 : index
    %0 = vector.load %arg1[%c0, %c0_0] : memref<16x192xbf16, #tpu.memory_space<vmem>>, vector<16x192xbf16>
    %c0_1 = arith.constant 0 : index
    %c0_2 = arith.constant 0 : index
    %1 = vector.load %arg2[%c0_1, %c0_2] : memref<528x128xbf16, #tpu.memory_space<vmem>>, vector<192x128xbf16>
    %cst = arith.constant dense<0.000000e+00> : vector<16x128xf32>
    %2 = tpu.matmul %0, %1, %cst {dimension_numbers = #tpu.dot_dimension_numbers<[1], [0], [0], [1], [0, 0, 1, 1], [], []>} : vector<16x192xbf16>, vector<192x128xbf16>, vector<16x128xf32> -> vector<16x128xf32>
    %c0_3 = arith.constant 0 : index
    %c0_4 = arith.constant 0 : index
    %3 = vector.load %arg3[%c0_3, %c0_4] : memref<16x128xf32, #tpu.memory_space<vmem>>, vector<1x128xf32>
    %4 = vector.broadcast %3 : vector<1x128xf32> to vector<16x128xf32>
    %5 = arith.addf %2, %4 : vector<16x128xf32>
    %cst_5 = arith.constant 0.000000e+00 : f32
    %6 = vector.broadcast %cst_5 : f32 to vector<16x128xf32>
    %7 = arith.maximumf %5, %6 : vector<16x128xf32>
    %8 = arith.truncf %7 : vector<16x128xf32> to vector<16x128xbf16>
    %c192 = arith.constant 192 : index
    %c0_6 = arith.constant 0 : index
    %9 = vector.load %arg2[%c192, %c0_6] : memref<528x128xbf16, #tpu.memory_space<vmem>>, vector<128x32xbf16>
    %cst_7 = arith.constant dense<0.000000e+00> : vector<16x32xf32>
    %10 = tpu.matmul %8, %9, %cst_7 {dimension_numbers = #tpu.dot_dimension_numbers<[1], [0], [0], [1], [0, 0, 1, 1], [], []>} : vector<16x128xbf16>, vector<128x32xbf16>, vector<16x32xf32> -> vector<16x32xf32>
    %c1 = arith.constant 1 : index
    %c0_8 = arith.constant 0 : index
    %11 = vector.load %arg3[%c1, %c0_8] : memref<16x128xf32, #tpu.memory_space<vmem>>, vector<1x32xf32>
    %12 = vector.broadcast %11 : vector<1x32xf32> to vector<16x32xf32>
    %13 = arith.addf %10, %12 : vector<16x32xf32>
    %cst_9 = arith.constant 0.000000e+00 : f32
    %14 = vector.broadcast %cst_9 : f32 to vector<16x32xf32>
    %15 = arith.maximumf %13, %14 : vector<16x32xf32>
    %16 = arith.truncf %15 : vector<16x32xf32> to vector<16x32xbf16>
    %c320 = arith.constant 320 : index
    %c0_10 = arith.constant 0 : index
    %17 = vector.load %arg2[%c320, %c0_10] : memref<528x128xbf16, #tpu.memory_space<vmem>>, vector<32x32xbf16>
    %cst_11 = arith.constant dense<0.000000e+00> : vector<16x32xf32>
    %18 = tpu.matmul %16, %17, %cst_11 {dimension_numbers = #tpu.dot_dimension_numbers<[1], [0], [0], [1], [0, 0, 1, 1], [], []>} : vector<16x32xbf16>, vector<32x32xbf16>, vector<16x32xf32> -> vector<16x32xf32>
    %c2 = arith.constant 2 : index
    %c0_12 = arith.constant 0 : index
    %19 = vector.load %arg3[%c2, %c0_12] : memref<16x128xf32, #tpu.memory_space<vmem>>, vector<1x32xf32>
    %20 = vector.broadcast %19 : vector<1x32xf32> to vector<16x32xf32>
    %21 = arith.addf %18, %20 : vector<16x32xf32>
    %cst_13 = arith.constant 0.000000e+00 : f32
    %22 = vector.broadcast %cst_13 : f32 to vector<16x32xf32>
    %23 = arith.maximumf %21, %22 : vector<16x32xf32>
    %24 = arith.truncf %23 : vector<16x32xf32> to vector<16x32xbf16>
    %c352 = arith.constant 352 : index
    %c0_14 = arith.constant 0 : index
    %25 = vector.load %arg2[%c352, %c0_14] : memref<528x128xbf16, #tpu.memory_space<vmem>>, vector<32x32xbf16>
    %cst_15 = arith.constant dense<0.000000e+00> : vector<16x32xf32>
    %26 = tpu.matmul %24, %25, %cst_15 {dimension_numbers = #tpu.dot_dimension_numbers<[1], [0], [0], [1], [0, 0, 1, 1], [], []>} : vector<16x32xbf16>, vector<32x32xbf16>, vector<16x32xf32> -> vector<16x32xf32>
    %c3 = arith.constant 3 : index
    %c0_16 = arith.constant 0 : index
    %27 = vector.load %arg3[%c3, %c0_16] : memref<16x128xf32, #tpu.memory_space<vmem>>, vector<1x32xf32>
    %28 = vector.broadcast %27 : vector<1x32xf32> to vector<16x32xf32>
    %29 = arith.addf %26, %28 : vector<16x32xf32>
    %cst_17 = arith.constant 0.000000e+00 : f32
    %30 = vector.broadcast %cst_17 : f32 to vector<16x32xf32>
    %31 = arith.maximumf %29, %30 : vector<16x32xf32>
    %32 = arith.truncf %31 : vector<16x32xf32> to vector<16x32xbf16>
    %c384 = arith.constant 384 : index
    %c0_18 = arith.constant 0 : index
    %33 = vector.load %arg2[%c384, %c0_18] : memref<528x128xbf16, #tpu.memory_space<vmem>>, vector<32x64xbf16>
    %cst_19 = arith.constant dense<0.000000e+00> : vector<16x64xf32>
    %34 = tpu.matmul %32, %33, %cst_19 {dimension_numbers = #tpu.dot_dimension_numbers<[1], [0], [0], [1], [0, 0, 1, 1], [], []>} : vector<16x32xbf16>, vector<32x64xbf16>, vector<16x64xf32> -> vector<16x64xf32>
    %c4 = arith.constant 4 : index
    %c0_20 = arith.constant 0 : index
    %35 = vector.load %arg3[%c4, %c0_20] : memref<16x128xf32, #tpu.memory_space<vmem>>, vector<1x64xf32>
    %36 = vector.broadcast %35 : vector<1x64xf32> to vector<16x64xf32>
    %37 = arith.addf %34, %36 : vector<16x64xf32>
    %cst_21 = arith.constant 0.000000e+00 : f32
    %38 = vector.broadcast %cst_21 : f32 to vector<16x64xf32>
    %39 = arith.maximumf %37, %38 : vector<16x64xf32>
    %40 = arith.truncf %39 : vector<16x64xf32> to vector<16x64xbf16>
    %c416 = arith.constant 416 : index
    %c0_22 = arith.constant 0 : index
    %41 = vector.load %arg2[%c416, %c0_22] : memref<528x128xbf16, #tpu.memory_space<vmem>>, vector<64x16xbf16>
    %cst_23 = arith.constant dense<0.000000e+00> : vector<16x16xf32>
    %42 = tpu.matmul %40, %41, %cst_23 {dimension_numbers = #tpu.dot_dimension_numbers<[1], [0], [0], [1], [0, 0, 1, 1], [], []>} : vector<16x64xbf16>, vector<64x16xbf16>, vector<16x16xf32> -> vector<16x16xf32>
    %c5 = arith.constant 5 : index
    %c0_24 = arith.constant 0 : index
    %43 = vector.load %arg3[%c5, %c0_24] : memref<16x128xf32, #tpu.memory_space<vmem>>, vector<1x16xf32>
    %44 = vector.broadcast %43 : vector<1x16xf32> to vector<16x16xf32>
    %45 = arith.addf %42, %44 : vector<16x16xf32>
    %cst_25 = arith.constant 0.000000e+00 : f32
    %46 = vector.broadcast %cst_25 : f32 to vector<16x16xf32>
    %47 = arith.maximumf %45, %46 : vector<16x16xf32>
    %48 = arith.truncf %47 : vector<16x16xf32> to vector<16x16xbf16>
    %c480 = arith.constant 480 : index
    %c0_26 = arith.constant 0 : index
    %49 = vector.load %arg2[%c480, %c0_26] : memref<528x128xbf16, #tpu.memory_space<vmem>>, vector<16x16xbf16>
    %cst_27 = arith.constant dense<0.000000e+00> : vector<16x16xf32>
    %50 = tpu.matmul %48, %49, %cst_27 {dimension_numbers = #tpu.dot_dimension_numbers<[1], [0], [0], [1], [0, 0, 1, 1], [], []>} : vector<16x16xbf16>, vector<16x16xbf16>, vector<16x16xf32> -> vector<16x16xf32>
    %c6 = arith.constant 6 : index
    %c0_28 = arith.constant 0 : index
    %51 = vector.load %arg3[%c6, %c0_28] : memref<16x128xf32, #tpu.memory_space<vmem>>, vector<1x16xf32>
    %52 = vector.broadcast %51 : vector<1x16xf32> to vector<16x16xf32>
    %53 = arith.addf %50, %52 : vector<16x16xf32>
    %cst_29 = arith.constant 0.000000e+00 : f32
    %54 = vector.broadcast %cst_29 : f32 to vector<16x16xf32>
    %55 = arith.maximumf %53, %54 : vector<16x16xf32>
    %56 = arith.truncf %55 : vector<16x16xf32> to vector<16x16xbf16>
    %c496 = arith.constant 496 : index
    %c0_30 = arith.constant 0 : index
    %57 = vector.load %arg2[%c496, %c0_30] : memref<528x128xbf16, #tpu.memory_space<vmem>>, vector<16x16xbf16>
    %cst_31 = arith.constant dense<0.000000e+00> : vector<16x16xf32>
    %58 = tpu.matmul %56, %57, %cst_31 {dimension_numbers = #tpu.dot_dimension_numbers<[1], [0], [0], [1], [0, 0, 1, 1], [], []>} : vector<16x16xbf16>, vector<16x16xbf16>, vector<16x16xf32> -> vector<16x16xf32>
    %c7 = arith.constant 7 : index
    %c0_32 = arith.constant 0 : index
    %59 = vector.load %arg3[%c7, %c0_32] : memref<16x128xf32, #tpu.memory_space<vmem>>, vector<1x16xf32>
    %60 = vector.broadcast %59 : vector<1x16xf32> to vector<16x16xf32>
    %61 = arith.addf %58, %60 : vector<16x16xf32>
    %cst_33 = arith.constant 0.000000e+00 : f32
    %62 = vector.broadcast %cst_33 : f32 to vector<16x16xf32>
    %63 = arith.maximumf %61, %62 : vector<16x16xf32>
    %64 = arith.truncf %63 : vector<16x16xf32> to vector<16x16xbf16>
    %c512 = arith.constant 512 : index
    %c0_34 = arith.constant 0 : index
    %65 = vector.load %arg2[%c512, %c0_34] : memref<528x128xbf16, #tpu.memory_space<vmem>>, vector<16x128xbf16>
    %cst_35 = arith.constant dense<0.000000e+00> : vector<16x128xf32>
    %66 = tpu.matmul %64, %65, %cst_35 {dimension_numbers = #tpu.dot_dimension_numbers<[1], [0], [0], [1], [0, 0, 1, 1], [], []>} : vector<16x16xbf16>, vector<16x128xbf16>, vector<16x128xf32> -> vector<16x128xf32>
    %c8 = arith.constant 8 : index
    %c0_36 = arith.constant 0 : index
    %67 = vector.load %arg3[%c8, %c0_36] : memref<16x128xf32, #tpu.memory_space<vmem>>, vector<1x128xf32>
    %68 = vector.broadcast %67 : vector<1x128xf32> to vector<16x128xf32>
    %69 = arith.addf %66, %68 : vector<16x128xf32>
    %c0_37 = arith.constant 0 : index
    %c0_38 = arith.constant 0 : index
    %70 = vector.load %arg4[%c0_37, %c0_38] : memref<16x128xf32, #tpu.memory_space<vmem>>, vector<16x128xf32>
    tpu.vector_store %arg4[%c0_37, %c0_38], %69 {strides = array<i32>} : memref<16x128xf32, #tpu.memory_space<vmem>>, vector<16x128xf32>,
    return
  }
  func.func @transform_0(%arg0: i32) -> (i32, i32) {
    %c0_i32 = arith.constant 0 : i32
    %c0_i32_0 = arith.constant 0 : i32
    return %arg0, %c0_i32 : i32, i32
  }
  func.func @transform_1(%arg0: i32) -> (i32, i32) {
    %c0_i32 = arith.constant 0 : i32
    %c0_i32_0 = arith.constant 0 : i32
    %c0_i32_1 = arith.constant 0 : i32
    return %c0_i32, %c0_i32_0 : i32, i32
  }
  func.func @transform_2(%arg0: i32) -> (i32, i32) {
    %c0_i32 = arith.constant 0 : i32
    %c0_i32_0 = arith.constant 0 : i32
    %c0_i32_1 = arith.constant 0 : i32
    return %c0_i32, %c0_i32_0 : i32, i32
  }
  func.func @transform_3(%arg0: i32) -> (i32, i32) {
    %c0_i32 = arith.constant 0 : i32
    %c0_i32_0 = arith.constant 0 : i32
    return %arg0, %c0_i32 : i32, i32
  }
}

</mosaic_0001>

<llo_original>
// kernel: forward.1
$region0: #{forward.1}
  #allocation0 [shape = 'u32[]', space=smem, size = 0x4, offset = 0x4, fixed_abs, tag = 'smem constant byte address 0x4 - core index']
  #allocation1 [shape = 'u32[72,128]{1,0:T(1,128)}', space=vmem, size = 0x9000, scoped, tag = 'internal scratch']
  %s0 = inlined_call_operand.vmem [shape: bf16[16,192], index: 0, kind: input, shape index: {}]
  %s1 = inlined_call_operand.hbm [shape: bf16[528,128], index: 1, kind: input, shape index: {}]
  %s2 = inlined_call_operand.vmem [shape: f32[16,128], index: 2, kind: input, shape index: {}]
  %s3 = inlined_call_operand.vmem [shape: f32[16,128], index: 3, kind: output, shape index: {}]
  %s4 = sld [smem:[#allocation0]]
  $region26: #{forward.1} parent=0
    _
  %s6 = ssub.s32 1, %s4
  %s7 = scalar_select 0, %s6, %s4
  $region1: #{forward.1} parent=0
    #allocation2 [shape = 'u8[135168]{0}', space=vmem, size = 0x21000, scoped, tag = 'input window, operand 1, single buffered']
    #allocation3 [shape = 's32[1]{0}', space=sflag, size = 0x4, scoped, tag = 'scoped memory for forward.1']
    %8 = vsyncpa [#allocation3], 0
    // Predicated region
    $region2: #{forward.1} parent=1 // pred_check
      _
    $region3: #{forward.1} parent=1 // pred_check_branch
      %10 = sbr.rel (0) target = $region5
    $region4: #{forward.1} parent=1 // pred_region
      _
    $region5: #{forward.1} parent=1 // pred_fallthru
      _
    // Predicated region
    $region6: #{forward.1} parent=1 // pred_check
      _
    $region7: #{forward.1} parent=1 // pred_check_branch
      %12 = sbr.rel (0) target = $region9
    $region8: #{forward.1} parent=1 // pred_region
      %14 = vsyncadd [#allocation3], 0
      %s15 = sshll.u32 %s1, 4
      %s16 = int_to_ptr.hbm [resolvable:$true] %s15
      %s17 = sshll.u32 [#allocation2], 4
      %s18 = int_to_ptr.vmem [resolvable:$true] %s17
      %23 = dma.hbm_to_vmem [thread:$0]  %s16, 4224, %s18, [#allocation3], 64, 64, 4
    $region9: #{forward.1} parent=1 // pred_fallthru
      _
    // Predicated region
    $region10: #{forward.1} parent=1 // pred_check
      _
    $region11: #{forward.1} parent=1 // pred_check_branch
      %25 = sbr.rel (0) target = $region13
    $region12: #{forward.1} parent=1 // pred_region
      _
    $region13: #{forward.1} parent=1 // pred_fallthru
      _
    // Predicated region
    $region14: #{forward.1} parent=1 // pred_check
      _
    $region15: #{forward.1} parent=1 // pred_check_branch
      %27 = sbr.rel (0) target = $region17
    $region16: #{forward.1} parent=1 // pred_region
      %29 = dma.done [#allocation3], 4224
    $region17: #{forward.1} parent=1 // pred_fallthru
      _
    %v31 = vld [vmem:[%s0] sm:$0xff]
    %v32 = vld [vmem:[%s0 + $0x8] sm:$0xff]
    %v33 = vld [vmem:[#allocation2] sm:$0xf]
    %v34 = vld [vmem:[#allocation2 + $0x4] sm:$0xf]
    %v35 = vld [vmem:[#allocation2 + $0x8] sm:$0xf]
    %v36 = vld [vmem:[#allocation2 + $0xc] sm:$0xf]
    %v37 = vld [vmem:[#allocation2 + $0x10] sm:$0xf]
    %v38 = vld [vmem:[#allocation2 + $0x14] sm:$0xf]
    %v39 = vld [vmem:[#allocation2 + $0x18] sm:$0xf]
    %v40 = vld [vmem:[#allocation2 + $0x1c] sm:$0xf]
    %v41 = vld [vmem:[#allocation2 + $0x20] sm:$0xf]
    %v42 = vld [vmem:[#allocation2 + $0x24] sm:$0xf]
    %v43 = vld [vmem:[#allocation2 + $0x28] sm:$0xf]
    %v44 = vld [vmem:[#allocation2 + $0x2c] sm:$0xf]
    %v45 = vld [vmem:[#allocation2 + $0x30] sm:$0xf]
    %v46 = vld [vmem:[#allocation2 + $0x34] sm:$0xf]
    %v47 = vld [vmem:[#allocation2 + $0x38] sm:$0xf]
    %v48 = vld [vmem:[#allocation2 + $0x3c] sm:$0xf]
    %v49 = vld [vmem:[#allocation2 + $0x40] sm:$0xf]
    %v50 = vld [vmem:[#allocation2 + $0x44] sm:$0xf]
    %v51 = vld [vmem:[#allocation2 + $0x48] sm:$0xf]
    %v52 = vld [vmem:[#allocation2 + $0x4c] sm:$0xf]
    %v53 = vld [vmem:[#allocation2 + $0x50] sm:$0xf]
    %v54 = vld [vmem:[#allocation2 + $0x54] sm:$0xf]
    %v55 = vld [vmem:[#allocation2 + $0x58] sm:$0xf]
    %v56 = vld [vmem:[#allocation2 + $0x5c] sm:$0xf]
    %v57 = vld [vmem:[%s2] sm:$0x1]
    %v58 = vperm.slane %v57, 0
    %v61 = vunpack.c.l.b16 %v31
    %v62 = vunpack.c.h.b16 %v31
    %v63 = vunpack.c.l.b16 %v32
    %v64 = vunpack.c.h.b16 %v32
    %v65 = vpack.c.b16 %v63, %v61
    %v66 = vpack.c.b16 %v64, %v62
    %v92 = vunpack.c.l.b16 %v33
    %v93 = vunpack.c.l.b16 %v34
    %v94 = vunpack.c.l.b16 %v35
    %v95 = vunpack.c.l.b16 %v36
    %v96 = vunpack.c.l.b16 %v37
    %v97 = vunpack.c.l.b16 %v38
    %v98 = vunpack.c.l.b16 %v39
    %v99 = vunpack.c.l.b16 %v40
    %v100 = vunpack.c.l.b16 %v41
    %v101 = vunpack.c.l.b16 %v42
    %v102 = vunpack.c.l.b16 %v43
    %v103 = vunpack.c.l.b16 %v44
    %v104 = vunpack.c.l.b16 %v45
    %v105 = vunpack.c.l.b16 %v46
    %v106 = vunpack.c.l.b16 %v47
    %v107 = vunpack.c.l.b16 %v48
    %v108 = vunpack.c.l.b16 %v49
    %v109 = vunpack.c.l.b16 %v50
    %v110 = vunpack.c.l.b16 %v51
    %v111 = vunpack.c.l.b16 %v52
    %v112 = vunpack.c.l.b16 %v53
    %v113 = vunpack.c.l.b16 %v54
    %v114 = vunpack.c.l.b16 %v55
    %v115 = vunpack.c.l.b16 %v56
    %v116 = vpack.c.b16 %v93, %v92
    %v117 = vpack.c.b16 %v95, %v94
    %v118 = vpack.c.b16 %v97, %v96
    %v119 = vpack.c.b16 %v99, %v98
    %v120 = vpack.c.b16 %v101, %v100
    %v121 = vpack.c.b16 %v103, %v102
    %v122 = vpack.c.b16 %v105, %v104
    %v123 = vpack.c.b16 %v107, %v106
    %v124 = vpack.c.b16 %v109, %v108
    %v125 = vpack.c.b16 %v111, %v110
    %v126 = vpack.c.b16 %v113, %v112
    %v127 = vpack.c.b16 %v115, %v114
    %vm140 = vcmask 523264
    %v142 = vsel %vm140, %v66, 0
    %144 = vmatpush.bf16.msra.mxu0 %v123
    %145 = vmatpush.bf16.msra.mxu0 %v122
    %146 = vmatpush.bf16.msra.mxu0 %v121
    %147 = vmatpush.bf16.msra.mxu0 %v120
    %148 = vmatpush.bf16.msra.mxu0 %v119
    %149 = vmatpush.bf16.msra.mxu0 %v118
    %150 = vmatpush.bf16.msra.mxu0 %v117
    %151 = vmatpush.bf16.msra.mxu0 %v116
    %152 = vmatmul.bf16.gmra.mxu0 %v65
    %v153 = vpop.f32.mrf.mxu0
    %v154 = vadd.f32 %v58, %v153
    %v155 = vpop.f32.mrf.mxu0
    %v156 = vadd.f32 %v58, %v155
    %157 = vdwg.mxu0
    %158 = vmatpush.bf16.msra.mxu0 0
    %159 = vmatpush.bf16.msra.mxu0 0
    %160 = vmatpush.bf16.msra.mxu0 0
    %161 = vmatpush.bf16.msra.mxu0 0
    %162 = vmatpush.bf16.msra.mxu0 %v127
    %163 = vmatpush.bf16.msra.mxu0 %v126
    %164 = vmatpush.bf16.msra.mxu0 %v125
    %165 = vmatpush.bf16.msra.mxu0 %v124
    %166 = vmatmul.bf16.gmra.mxu0 %v142
    %v167 = vpop.f32.mrf.mxu0
    %v168 = vadd.f32 %v154, %v167
    %v169 = vpop.f32.mrf.mxu0
    %v170 = vadd.f32 %v156, %v169
    %171 = vdwg.mxu0
    %v172 = vmax.f32 %v168, 0.0
    %v173 = vmax.f32 %v170, 0.0
    %v174 = vpack.c.bf16 %v173, %v172
    %v175 = vld [vmem:[#allocation2 + $0x60] sm:$0xf]
    %v176 = vld [vmem:[#allocation2 + $0x64] sm:$0xf]
    %v177 = vld [vmem:[#allocation2 + $0x68] sm:$0xf]
    %v178 = vld [vmem:[#allocation2 + $0x6c] sm:$0xf]
    %v179 = vld [vmem:[#allocation2 + $0x70] sm:$0xf]
    %v180 = vld [vmem:[#allocation2 + $0x74] sm:$0xf]
    %v181 = vld [vmem:[#allocation2 + $0x78] sm:$0xf]
    %v182 = vld [vmem:[#allocation2 + $0x7c] sm:$0xf]
    %v183 = vld [vmem:[#allocation2 + $0x80] sm:$0xf]
    %v184 = vld [vmem:[#allocation2 + $0x84] sm:$0xf]
    %v185 = vld [vmem:[#allocation2 + $0x88] sm:$0xf]
    %v186 = vld [vmem:[#allocation2 + $0x8c] sm:$0xf]
    %v187 = vld [vmem:[#allocation2 + $0x90] sm:$0xf]
    %v188 = vld [vmem:[#allocation2 + $0x94] sm:$0xf]
    %v189 = vld [vmem:[#allocation2 + $0x98] sm:$0xf]
    %v190 = vld [vmem:[#allocation2 + $0x9c] sm:$0xf]
    %v191 = vld [vmem:[%s2 + $0x1] sm:$0x1]
    %v192 = vperm.slane %v191, 0
    %v209 = vunpack.c.l.b16 %v175
    %v210 = vunpack.c.l.b16 %v176
    %v211 = vunpack.c.l.b16 %v177
    %v212 = vunpack.c.l.b16 %v178
    %v213 = vunpack.c.l.b16 %v179
    %v214 = vunpack.c.l.b16 %v180
    %v215 = vunpack.c.l.b16 %v181
    %v216 = vunpack.c.l.b16 %v182
    %v217 = vunpack.c.l.b16 %v183
    %v218 = vunpack.c.l.b16 %v184
    %v219 = vunpack.c.l.b16 %v185
    %v220 = vunpack.c.l.b16 %v186
    %v221 = vunpack.c.l.b16 %v187
    %v222 = vunpack.c.l.b16 %v188
    %v223 = vunpack.c.l.b16 %v189
    %v224 = vunpack.c.l.b16 %v190
    %v225 = vpack.c.b16 %v210, %v209
    %v226 = vpack.c.b16 %v212, %v211
    %v227 = vpack.c.b16 %v214, %v213
    %v228 = vpack.c.b16 %v216, %v215
    %v229 = vpack.c.b16 %v218, %v217
    %v230 = vpack.c.b16 %v220, %v219
    %v231 = vpack.c.b16 %v222, %v221
    %v232 = vpack.c.b16 %v224, %v223
    %241 = vmatpush.bf16.msra.mxu0 %v232
    %242 = vmatpush.bf16.msra.mxu0 %v231
    %243 = vmatpush.bf16.msra.mxu0 %v230
    %244 = vmatpush.bf16.msra.mxu0 %v229
    %245 = vmatpush.bf16.msra.mxu0 %v228
    %246 = vmatpush.bf16.msra.mxu0 %v227
    %247 = vmatpush.bf16.msra.mxu0 %v226
    %248 = vmatpush.bf16.msra.mxu0 %v225
    %249 = vmatmul.bf16.gmra.mxu0 %v174
    %v250 = vpop.f32.mrf.mxu0
    %v251 = vadd.f32 %v192, %v250
    %v252 = vpop.f32.mrf.mxu0
    %v253 = vadd.f32 %v192, %v252
    %254 = vdwg.mxu0
    %v255 = vmax.f32 %v251, 0.0
    %v256 = vmax.f32 %v253, 0.0
    %v257 = vpack.c.bf16 %v256, %v255
    %v258 = vld [vmem:[#allocation2 + $0xa0] sm:$0xf]
    %v259 = vld [vmem:[#allocation2 + $0xa4] sm:$0xf]
    %v260 = vld [vmem:[#allocation2 + $0xa8] sm:$0xf]
    %v261 = vld [vmem:[#allocation2 + $0xac] sm:$0xf]
    %v262 = vld [vmem:[%s2 + $0x2] sm:$0x1]
    %v263 = vperm.slane %v262, 0
    %v268 = vunpack.c.l.b16 %v258
    %v269 = vunpack.c.l.b16 %v259
    %v270 = vunpack.c.l.b16 %v260
    %v271 = vunpack.c.l.b16 %v261
    %v272 = vpack.c.b16 %v269, %v268
    %v273 = vpack.c.b16 %v271, %v270
    %vm276 = vcmask 261120
    %v278 = vsel %vm276, %v257, 0
    %280 = vmatpush.bf16.msra.mxu0 0
    %281 = vmatpush.bf16.msra.mxu0 0
    %282 = vmatpush.bf16.msra.mxu0 0
    %283 = vmatpush.bf16.msra.mxu0 0
    %284 = vmatpush.bf16.msra.mxu0 0
    %285 = vmatpush.bf16.msra.mxu0 0
    %286 = vmatpush.bf16.msra.mxu0 %v273
    %287 = vmatpush.bf16.msra.mxu0 %v272
    %288 = vmatmul.bf16.gmra.mxu0 %v278
    %v289 = vpop.f32.mrf.mxu0
    %v290 = vadd.f32 %v263, %v289
    %v291 = vpop.f32.mrf.mxu0
    %v292 = vadd.f32 %v263, %v291
    %293 = vdwg.mxu0
    %v294 = vmax.f32 %v290, 0.0
    %v295 = vmax.f32 %v292, 0.0
    %v296 = vpack.c.bf16 %v295, %v294
    %v297 = vld [vmem:[#allocation2 + $0xb0] sm:$0xf]
    %v298 = vld [vmem:[#allocation2 + $0xb4] sm:$0xf]
    %v299 = vld [vmem:[#allocation2 + $0xb8] sm:$0xf]
    %v300 = vld [vmem:[#allocation2 + $0xbc] sm:$0xf]
    %v301 = vld [vmem:[%s2 + $0x3] sm:$0x1]
    %v302 = vperm.slane %v301, 0
    %v307 = vunpack.c.l.b16 %v297
    %v308 = vunpack.c.l.b16 %v298
    %v309 = vunpack.c.l.b16 %v299
    %v310 = vunpack.c.l.b16 %v300
    %v311 = vpack.c.b16 %v308, %v307
    %v312 = vpack.c.b16 %v310, %v309
    %v316 = vsel %vm276, %v296, 0
    %318 = vmatpush.bf16.msra.mxu0 0
    %319 = vmatpush.bf16.msra.mxu0 0
    %320 = vmatpush.bf16.msra.mxu0 0
    %321 = vmatpush.bf16.msra.mxu0 0
    %322 = vmatpush.bf16.msra.mxu0 0
    %323 = vmatpush.bf16.msra.mxu0 0
    %324 = vmatpush.bf16.msra.mxu0 %v312
    %325 = vmatpush.bf16.msra.mxu0 %v311
    %326 = vmatmul.bf16.gmra.mxu0 %v316
    %v327 = vpop.f32.mrf.mxu0
    %v328 = vadd.f32 %v302, %v327
    %v329 = vpop.f32.mrf.mxu0
    %v330 = vadd.f32 %v302, %v329
    %331 = vdwg.mxu0
    %v332 = vmax.f32 %v328, 0.0
    %v333 = vmax.f32 %v330, 0.0
    %v334 = vpack.c.bf16 %v333, %v332
    %v335 = vld [vmem:[#allocation2 + $0xc0] sm:$0xf]
    %v336 = vld [vmem:[#allocation2 + $0xc4] sm:$0xf]
    %v337 = vld [vmem:[#allocation2 + $0xc8] sm:$0xf]
    %v338 = vld [vmem:[#allocation2 + $0xcc] sm:$0xf]
    %v339 = vld [vmem:[%s2 + $0x4] sm:$0x1]
    %v340 = vperm.slane %v339, 0
    %v345 = vunpack.c.l.b16 %v335
    %v346 = vunpack.c.l.b16 %v336
    %v347 = vunpack.c.l.b16 %v337
    %v348 = vunpack.c.l.b16 %v338
    %v349 = vpack.c.b16 %v346, %v345
    %v350 = vpack.c.b16 %v348, %v347
    %v354 = vsel %vm276, %v334, 0
    %356 = vmatpush.bf16.msra.mxu0 0
    %357 = vmatpush.bf16.msra.mxu0 0
    %358 = vmatpush.bf16.msra.mxu0 0
    %359 = vmatpush.bf16.msra.mxu0 0
    %360 = vmatpush.bf16.msra.mxu0 0
    %361 = vmatpush.bf16.msra.mxu0 0
    %362 = vmatpush.bf16.msra.mxu0 %v350
    %363 = vmatpush.bf16.msra.mxu0 %v349
    %364 = vmatmul.bf16.gmra.mxu0 %v354
    %v365 = vpop.f32.mrf.mxu0
    %v366 = vadd.f32 %v340, %v365
    %v367 = vpop.f32.mrf.mxu0
    %v368 = vadd.f32 %v340, %v367
    %369 = vdwg.mxu0
    %v370 = vmax.f32 %v366, 0.0
    %v371 = vmax.f32 %v368, 0.0
    %v372 = vpack.c.bf16 %v371, %v370
    %v373 = vld [vmem:[#allocation2 + $0xd0] sm:$0xf]
    %v374 = vld [vmem:[#allocation2 + $0xd4] sm:$0xf]
    %v375 = vld [vmem:[#allocation2 + $0xd8] sm:$0xf]
    %v376 = vld [vmem:[#allocation2 + $0xdc] sm:$0xf]
    %v377 = vld [vmem:[#allocation2 + $0xe0] sm:$0xf]
    %v378 = vld [vmem:[#allocation2 + $0xe4] sm:$0xf]
    %v379 = vld [vmem:[#allocation2 + $0xe8] sm:$0xf]
    %v380 = vld [vmem:[#allocation2 + $0xec] sm:$0xf]
    %v381 = vld [vmem:[%s2 + $0x5] sm:$0x1]
    %v382 = vperm.slane %v381, 0
    %v391 = vunpack.c.l.b16 %v373
    %v392 = vunpack.c.l.b16 %v374
    %v393 = vunpack.c.l.b16 %v375
    %v394 = vunpack.c.l.b16 %v376
    %v395 = vunpack.c.l.b16 %v377
    %v396 = vunpack.c.l.b16 %v378
    %v397 = vunpack.c.l.b16 %v379
    %v398 = vunpack.c.l.b16 %v380
    %v399 = vpack.c.b16 %v392, %v391
    %v400 = vpack.c.b16 %v394, %v393
    %v401 = vpack.c.b16 %v396, %v395
    %v402 = vpack.c.b16 %v398, %v397
    %v408 = vsel %vm140, %v372, 0
    %410 = vmatpush.bf16.msra.mxu0 0
    %411 = vmatpush.bf16.msra.mxu0 0
    %412 = vmatpush.bf16.msra.mxu0 0
    %413 = vmatpush.bf16.msra.mxu0 0
    %414 = vmatpush.bf16.msra.mxu0 %v402
    %415 = vmatpush.bf16.msra.mxu0 %v401
    %416 = vmatpush.bf16.msra.mxu0 %v400
    %417 = vmatpush.bf16.msra.mxu0 %v399
    %418 = vmatmul.bf16.gmra.mxu0 %v408
    %v419 = vpop.f32.mrf.mxu0
    %v420 = vadd.f32 %v382, %v419
    %v421 = vpop.f32.mrf.mxu0
    %v422 = vadd.f32 %v382, %v421
    %423 = vdwg.mxu0
    %v424 = vmax.f32 %v420, 0.0
    %v425 = vmax.f32 %v422, 0.0
    %v426 = vpack.c.bf16 %v425, %v424
    %v427 = vld [vmem:[#allocation2 + $0xf0] sm:$0xf]
    %v428 = vld [vmem:[#allocation2 + $0xf4] sm:$0xf]
    %v429 = vld [vmem:[%s2 + $0x6] sm:$0x1]
    %v430 = vperm.slane %v429, 0
    %v433 = vunpack.c.l.b16 %v427
    %v434 = vunpack.c.l.b16 %v428
    %v435 = vpack.c.b16 %v434, %v433
    %vm437 = vcmask 130048
    %v439 = vsel %vm437, %v426, 0
    %441 = vmatpush.bf16.msra.mxu0 0
    %442 = vmatpush.bf16.msra.mxu0 0
    %443 = vmatpush.bf16.msra.mxu0 0
    %444 = vmatpush.bf16.msra.mxu0 0
    %445 = vmatpush.bf16.msra.mxu0 0
    %446 = vmatpush.bf16.msra.mxu0 0
    %447 = vmatpush.bf16.msra.mxu0 0
    %448 = vmatpush.bf16.msra.mxu0 %v435
    %449 = vmatmul.bf16.gmra.mxu0 %v439
    %v450 = vpop.f32.mrf.mxu0
    %v451 = vadd.f32 %v430, %v450
    %v452 = vpop.f32.mrf.mxu0
    %v453 = vadd.f32 %v430, %v452
    %454 = vdwg.mxu0
    %v455 = vmax.f32 %v451, 0.0
    %v456 = vmax.f32 %v453, 0.0
    %v457 = vpack.c.bf16 %v456, %v455
    %v458 = vld [vmem:[#allocation2 + $0xf8] sm:$0xf]
    %v459 = vld [vmem:[#allocation2 + $0xfc] sm:$0xf]
    %v460 = vld [vmem:[%s2 + $0x7] sm:$0x1]
    %v461 = vperm.slane %v460, 0
    %v464 = vunpack.c.l.b16 %v458
    %v465 = vunpack.c.l.b16 %v459
    %v466 = vpack.c.b16 %v465, %v464
    %v469 = vsel %vm437, %v457, 0
    %471 = vmatpush.bf16.msra.mxu0 0
    %472 = vmatpush.bf16.msra.mxu0 0
    %473 = vmatpush.bf16.msra.mxu0 0
    %474 = vmatpush.bf16.msra.mxu0 0
    %475 = vmatpush.bf16.msra.mxu0 0
    %476 = vmatpush.bf16.msra.mxu0 0
    %477 = vmatpush.bf16.msra.mxu0 0
    %478 = vmatpush.bf16.msra.mxu0 %v466
    %479 = vmatmul.bf16.gmra.mxu0 %v469
    %v480 = vpop.f32.mrf.mxu0
    %v481 = vadd.f32 %v461, %v480
    %v482 = vpop.f32.mrf.mxu0
    %v483 = vadd.f32 %v461, %v482
    %484 = vdwg.mxu0
    %v485 = vmax.f32 %v481, 0.0
    %v486 = vmax.f32 %v483, 0.0
    %v487 = vpack.c.bf16 %v486, %v485
    %v488 = vld [vmem:[#allocation2 + $0x100] sm:$0xf]
    %v489 = vld [vmem:[#allocation2 + $0x104] sm:$0xf]
    %v490 = vld [vmem:[%s2 + $0x8] sm:$0x1]
    %v491 = vperm.slane %v490, 0
    %v494 = vunpack.c.l.b16 %v488
    %v495 = vunpack.c.l.b16 %v489
    %v496 = vpack.c.b16 %v495, %v494
    %v499 = vsel %vm437, %v487, 0
    %501 = vmatpush.bf16.msra.mxu0 0
    %502 = vmatpush.bf16.msra.mxu0 0
    %503 = vmatpush.bf16.msra.mxu0 0
    %504 = vmatpush.bf16.msra.mxu0 0
    %505 = vmatpush.bf16.msra.mxu0 0
    %506 = vmatpush.bf16.msra.mxu0 0
    %507 = vmatpush.bf16.msra.mxu0 0
    %508 = vmatpush.bf16.msra.mxu0 %v496
    %509 = vmatmul.bf16.gmra.mxu0 %v499
    %v510 = vpop.f32.mrf.mxu0
    %v511 = vadd.f32 %v491, %v510
    %v512 = vpop.f32.mrf.mxu0
    %v513 = vadd.f32 %v491, %v512
    %514 = vdwg.mxu0
    %515 = vst [vmem:[%s3] sm:$0xff] %v511
    %516 = vst [vmem:[%s3 + $0x8] sm:$0xff] %v513
    // Predicated region
    $region18: #{forward.1} parent=1 // pred_check
      _
    $region19: #{forward.1} parent=1 // pred_check_branch
      %518 = sbr.rel (0) target = $region21
    $region20: #{forward.1} parent=1 // pred_region
      _
    $region21: #{forward.1} parent=1 // pred_fallthru
      _
    // Predicated region
    $region22: #{forward.1} parent=1 // pred_check
      _
    $region23: #{forward.1} parent=1 // pred_check_branch
      %520 = sbr.rel (0) target = $region25
    $region24: #{forward.1} parent=1 // pred_region
      _
    $region25: #{forward.1} parent=1 // pred_fallthru
      _
    %521 = vsyncpa [#allocation3], 1

</llo_original>
